<compile_context>
chip_gen: v6e
topology: v6e:2x2x1
jax: 0.10.0
libtpu: 0.0.40
codegen_flags: <defaults>
</compile_context>

<pallas_src>
import functools

import jax
import jax.numpy as jnp
from jax import lax
from jax.experimental import pallas as pl
from jax.experimental.pallas import tpu as pltpu

ALPHA = 0.8      # alpha table = [1.0, ALPHA], indexed by the binary target
GAMMA = 2.0
REDUCTION = "mean"


def _cdiv(a: int, b: int) -> int:
    return -(-a // b)


def _round_up(x: int, m: int) -> int:
    return ((x + m - 1) // m) * m


def _default_num_splits() -> int:
    """2 on chips with 2 TensorCores behind one device (v7x, megacore v4/v5p),
    1 on single-TC chips (v5e/v6e) so the padding granularity stays small."""
    try:
        kind = jax.devices()[0].device_kind.lower()
    except Exception:
        return 1
    return 2 if any(tag in kind for tag in ("v7", "v5p", "v4")) else 1


def _focal_kernel(x_ref, t_ref, out_ref, *, alpha: float, gamma: float,
                  n_valid: int, rows_per_block: int):
    """One (2, R, 128) logits / (R, 128) target block; folds its loss into the
    resident (8, 128) accumulator block of this split."""
    s = pl.program_id(0)                     # split index ("parallel")
    i = pl.program_id(1)                     # tile index within split ("arbitrary")
    nt = pl.num_programs(1)

    @pl.when(i == 0)
    def _init():
        out_ref[...] = jnp.zeros_like(out_ref)

    x0 = x_ref[0].astype(jnp.float32)        # (R, 128) class-0 logits
    x1 = x_ref[1].astype(jnp.float32)        # (R, 128) class-1 logits
    is_pos = t_ref[...] != 0                 # (R, 128) bool targets

    # Closed-form binary CE: d = picked - other, ce = softplus(-d).
    delta = x1 - x0
    adl = jnp.abs(delta)
    correct = (delta >= 0.0) == is_pos       # sign(picked - other) >= 0
    e = jnp.exp(-adl)                                        # EUP
    log1pe = jnp.log1p(e)                                    # EUP (log1p, stable)
    ce = jnp.where(correct, log1pe, adl + log1pe)            # softplus(-d) >= 0
    # w = 1 - pt = sigmoid(-(picked - other)), computed without cancellation
    # and without the extra exp(-ce).  approx=True would trade ~1e-3 rel. error
    # for a cheaper EUP vrcp; exact kept for tight agreement with the reference.
    r = pl.reciprocal(1.0 + e, approx=False)
    w = jnp.where(correct, e * r, r)

    at = jnp.where(is_pos, jnp.float32(alpha), jnp.float32(1.0))
    if gamma == 2.0:
        fw = w * w                           # avoid pow -> exp/log pair
    elif gamma == 1.0:
        fw = w
    else:
        fw = jnp.power(w, jnp.float32(gamma))
    loss = at * fw * ce                      # (R, 128)

    nblk = rows_per_block * 128
    start = (s * nt + i) * nblk              # first global sample of this block

    def _accumulate(vals):
        # (R, 128) -> (R//8, 8, 128) is a tile-aligned leading-dim split; the
        # axis-0 sum is just R//8 vector adds onto the (8,128) accumulator.
        out_ref[...] += jnp.sum(vals.reshape(rows_per_block // 8, 8, 128), axis=0)

    # Steady state: no masking at all (padding is only in the last block).
    @pl.when(start + nblk <= n_valid)
    def _full():
        _accumulate(loss)

    # Only the block overlapping the real N pays for the boundary mask.
    @pl.when(start + nblk > n_valid)
    def _partial():
        row = lax.broadcasted_iota(jnp.int32, (rows_per_block, 128), 0)
        lane = lax.broadcasted_iota(jnp.int32, (rows_per_block, 128), 1)
        idx = start + row * 128 + lane
        _accumulate(jnp.where(idx < n_valid, loss, 0.0))


def focal_loss(logits, target, *, alpha: float = ALPHA, gamma: float = GAMMA,
               reduction: str = REDUCTION, rows_per_block: int = 1024,
               num_splits=None):
    """logits: (N, 2) float (any dtype) row-major, or (2, N) class-major;
    target: (N,) int/bool in {0, 1}."""
    if logits.ndim != 2:
        raise ValueError("expected 2-D logits")
    if logits.shape[1] == 2:
        # Row-major producer layout: one fused transpose+pad+reshape XLA pass.
        n = logits.shape[0]
        x_cls = jnp.transpose(logits)                     # (2, N), native dtype
    elif logits.shape[0] == 2:
        # Class-major producer layout: no relayout pass at all.
        n = logits.shape[1]
        x_cls = logits
    else:
        raise ValueError("binary focal loss expects exactly 2 classes")
    if target.shape != (n,):
        raise ValueError("target must be shape (N,)")
    if not (jnp.issubdtype(target.dtype, jnp.integer) or target.dtype == jnp.bool_):
        target = target.astype(jnp.int32)

    if num_splits is None:
        num_splits = _default_num_splits()

    # Block sizing: R rows of 128 samples; shrink for small N, keep R a
    # multiple of 32 so f32/bf16/int8 sublane tilings all divide it.
    rows_needed = _cdiv(n, 128)
    rpb = max(32, min(_round_up(rows_per_block, 32), _round_up(rows_needed, 32)))
    spb = rpb * 128                                       # samples per block
    tiles_per_split = _cdiv(n, spb * num_splits)
    g_pad = tiles_per_split * num_splits * rpb
    n_pad = g_pad * 128

    if n_pad != n:
        x_cls = jnp.pad(x_cls, ((0, 0), (0, n_pad - n)))
        target = jnp.pad(target, (0, n_pad - n))
    x_cls = x_cls.reshape(2, g_pad, 128)                  # lane-dense, class-major
    t2 = target.reshape(g_pad, 128)

    kernel = functools.partial(_focal_kernel, alpha=float(alpha),
                               gamma=float(gamma), n_valid=n,
                               rows_per_block=rpb)

    acc = pl.pallas_call(
        kernel,
        out_shape=jax.ShapeDtypeStruct((num_splits * 8, 128), jnp.float32),
        grid_spec=pltpu.PrefetchScalarGridSpec(
            num_scalar_prefetch=0,
            grid=(num_splits, tiles_per_split),
            in_specs=[
                pl.BlockSpec((2, rpb, 128),
                             lambda s, i: (0, s * tiles_per_split + i, 0)),
                pl.BlockSpec((rpb, 128),
                             lambda s, i: (s * tiles_per_split + i, 0)),
            ],
            # Resident (8,128) accumulator per split: same block across the
            # reduction axis i, distinct block per split s.
            out_specs=pl.BlockSpec((8, 128), lambda s, i: (s, 0)),
        ),
        compiler_params=pltpu.CompilerParams(
            dimension_semantics=("parallel", "arbitrary"),
        ),
    )(x_cls, t2)

    total = jnp.sum(acc)                      # num_splits * 8 * 128 floats
    if reduction == "mean":
        total = total / jnp.float32(n)        # divide by GLOBAL N
    return total


def focal_loss_ref(logits, target, alpha=ALPHA, gamma=GAMMA, reduction=REDUCTION):
    """Pure-JAX reference mirroring the PyTorch module."""
    logits = logits.astype(jnp.float32)
    lse = jax.scipy.special.logsumexp(logits, axis=-1)
    picked = jnp.take_along_axis(logits, target[:, None].astype(jnp.int32),
                                 axis=-1)[:, 0]
    ce = lse - picked
    pt = jnp.exp(-ce)
    alpha_table = jnp.array([1.0, alpha], dtype=jnp.float32)
    at = alpha_table[target]
    loss = at * (1.0 - pt) ** gamma * ce
    return jnp.mean(loss) if reduction == "mean" else jnp.sum(loss)


if __name__ == "__main__":
    key = jax.random.PRNGKey(0)
    k1, k2, k3, k4, k5, k6 = jax.random.split(key, 6)

    focal = jax.jit(focal_loss)
    # Forces several grid steps, both splits, and the full/partial accumulate paths.
    focal_small_blocks = jax.jit(
        lambda a, b: focal_loss(a, b, rows_per_block=32, num_splits=2))

    # Small case consistent with the module: binary logits (N, 2), N = 8.
    N1 = 8
    logits1 = jax.random.normal(k1, (N1, 2), dtype=jnp.float32)
    target1 = jax.random.randint(k2, (N1,), 0, 2, dtype=jnp.int32)
    out1 = jax.block_until_ready(focal(logits1, target1))
    ref1 = focal_loss_ref(logits1, target1)
    assert jnp.allclose(out1, ref1, atol=1e-5, rtol=1e-5), (out1, ref1)

    # Non-multiple-of-128 case: exercises the boundary mask path.
    N2 = 300
    logits2 = jax.random.normal(k3, (N2, 2), dtype=jnp.float32)
    target2 = jax.random.randint(k4, (N2,), 0, 2, dtype=jnp.int32)
    out2 = jax.block_until_ready(focal(logits2, target2))
    ref2 = focal_loss_ref(logits2, target2)
    assert jnp.allclose(out2, ref2, atol=1e-5, rtol=1e-5), (out2, ref2)

    # Multi-step grid with small forced blocks: both splits, full + partial tiles.
    N3 = 20000
    logits3 = jax.random.normal(k5, (N3, 2), dtype=jnp.float32)
    target3 = jax.random.randint(k6, (N3,), 0, 2, dtype=jnp.int32)
    out3 = jax.block_until_ready(focal_small_blocks(logits3, target3))
    ref3 = focal_loss_ref(logits3, target3)
    assert jnp.allclose(out3, ref3, atol=1e-5, rtol=1e-5), (out3, ref3)

    print("KERNEL_OK")
</pallas_src>

<mosaic_0001>
module attributes {stable_mosaic.version = 11 : i64} {
  func.func @_focal_kernel(%arg0: i32, %arg1: i32, %arg2: memref<2x32x128xf32, #tpu.memory_space<vmem>>, %arg3: memref<32x128xi32, #tpu.memory_space<vmem>>, %arg4: memref<8x128xf32, #tpu.memory_space<vmem>>) attributes {dimension_semantics = [#tpu.dimension_semantics<parallel>, #tpu.dimension_semantics<arbitrary>], iteration_bounds = array<i64: 1, 1>, scalar_prefetch = 0 : i64, scratch_operands = 0 : i64, tpu.core_type = #tpu.core_type<tc>, window_params = [{transform_indices = @transform_0, window_bounds = array<i64: 2, 32, 128>}, {transform_indices = @transform_1, window_bounds = array<i64: 32, 128>}, {transform_indices = @transform_2, window_bounds = array<i64: 8, 128>}]} {
    %c0_i32 = arith.constant 0 : i32
    %0 = arith.cmpi eq, %arg1, %c0_i32 : i32
    %1 = arith.extui %0 : i1 to i32
    %c0_i32_0 = arith.constant 0 : i32
    %2 = arith.cmpi ne, %1, %c0_i32_0 : i32
    scf.if %2 {
      %cst_18 = arith.constant 0.000000e+00 : f32
      %44 = vector.broadcast %cst_18 : f32 to vector<8x128xf32>
      %c0_19 = arith.constant 0 : index
      %c0_20 = arith.constant 0 : index
      %45 = vector.load %arg4[%c0_19, %c0_20] : memref<8x128xf32, #tpu.memory_space<vmem>>, vector<8x128xf32>
      tpu.vector_store %arg4[%c0_19, %c0_20], %44 {strides = array<i32>} : memref<8x128xf32, #tpu.memory_space<vmem>>, vector<8x128xf32>,
    } else {
    }
    %c0 = arith.constant 0 : index
    %c0_1 = arith.constant 0 : index
    %c0_2 = arith.constant 0 : index
    %3 = vector.load %arg2[%c0, %c0_1, %c0_2] : memref<2x32x128xf32, #tpu.memory_space<vmem>>, vector<1x32x128xf32>
    %4 = vector.shape_cast %3 : vector<1x32x128xf32> to vector<32x128xf32>
    %c1 = arith.constant 1 : index
    %c0_3 = arith.constant 0 : index
    %c0_4 = arith.constant 0 : index
    %5 = vector.load %arg2[%c1, %c0_3, %c0_4] : memref<2x32x128xf32, #tpu.memory_space<vmem>>, vector<1x32x128xf32>
    %6 = vector.shape_cast %5 : vector<1x32x128xf32> to vector<32x128xf32>
    %c0_5 = arith.constant 0 : index
    %c0_6 = arith.constant 0 : index
    %7 = vector.load %arg3[%c0_5, %c0_6] : memref<32x128xi32, #tpu.memory_space<vmem>>, vector<32x128xi32>
    %c0_i32_7 = arith.constant 0 : i32
    %8 = vector.broadcast %c0_i32_7 : i32 to vector<32x128xi32>
    %9 = arith.cmpi ne, %7, %8 : vector<32x128xi32>
    %10 = arith.subf %6, %4 : vector<32x128xf32>
    %11 = math.absf %10 : vector<32x128xf32>
    %cst = arith.constant 0.000000e+00 : f32
    %12 = vector.broadcast %cst : f32 to vector<32x128xf32>
    %13 = arith.cmpf oge, %10, %12 : vector<32x128xf32>
    %14 = arith.xori %13, %9 : vector<32x128xi1>
    %cst_8 = arith.constant dense<true> : vector<32x128xi1>
    %15 = arith.xori %14, %cst_8 : vector<32x128xi1>
    %cst_9 = arith.constant 0.000000e+00 : f32
    %16 = vector.broadcast %cst_9 : f32 to vector<32x128xf32>
    %17 = arith.subf %16, %11 : vector<32x128xf32>
    %18 = math.exp %17 : vector<32x128xf32>
    %19 = math.log1p %18 : vector<32x128xf32>
    %20 = arith.addf %11, %19 : vector<32x128xf32>
    %21 = arith.select %15, %19, %20 : vector<32x128xi1>, vector<32x128xf32>
    %cst_10 = arith.constant 1.000000e+00 : f32
    %22 = vector.broadcast %cst_10 : f32 to vector<32x128xf32>
    %23 = arith.addf %22, %18 : vector<32x128xf32>
    %24 = tpu.reciprocal %23 : vector<32x128xf32> -> vector<32x128xf32>
    %25 = arith.mulf %18, %24 : vector<32x128xf32>
    %26 = arith.select %15, %25, %24 : vector<32x128xi1>, vector<32x128xf32>
    %cst_11 = arith.constant 8.000000e-01 : f32
    %cst_12 = arith.constant 1.000000e+00 : f32
    %27 = vector.broadcast %cst_11 : f32 to vector<32x128xf32>
    %28 = vector.broadcast %cst_12 : f32 to vector<32x128xf32>
    %29 = arith.select %9, %27, %28 : vector<32x128xi1>, vector<32x128xf32>
    %30 = arith.mulf %26, %26 : vector<32x128xf32>
    %31 = arith.mulf %29, %30 : vector<32x128xf32>
    %32 = arith.mulf %31, %21 : vector<32x128xf32>
    %c1_i32 = arith.constant 1 : i32
    %33 = arith.muli %arg0, %c1_i32 : i32
    %34 = arith.addi %33, %arg1 : i32
    %c4096_i32 = arith.constant 4096 : i32
    %35 = arith.muli %34, %c4096_i32 : i32
    %c4096_i32_13 = arith.constant 4096 : i32
    %36 = arith.addi %35, %c4096_i32_13 : i32
    %c8_i32 = arith.constant 8 : i32
    %37 = arith.cmpi sle, %36, %c8_i32 : i32
    %38 = arith.extui %37 : i1 to i32
    %c0_i32_14 = arith.constant 0 : i32
    %39 = arith.cmpi ne, %38, %c0_i32_14 : i32
    scf.if %39 {
      %c0_18 = arith.constant 0 : index
      %c0_19 = arith.constant 0 : index
      %44 = vector.load %arg4[%c0_18, %c0_19] : memref<8x128xf32, #tpu.memory_space<vmem>>, vector<8x128xf32>
      %45 = vector.shape_cast %32 : vector<32x128xf32> to vector<4x8x128xf32>
      %cst_20 = arith.constant dense<0.000000e+00> : vector<8x128xf32>
      %46 = vector.multi_reduction <add>, %45, %cst_20 [0] : vector<4x8x128xf32> to vector<8x128xf32>
      %47 = arith.addf %44, %46 : vector<8x128xf32>
      %c0_21 = arith.constant 0 : index
      %c0_22 = arith.constant 0 : index
      %48 = vector.load %arg4[%c0_21, %c0_22] : memref<8x128xf32, #tpu.memory_space<vmem>>, vector<8x128xf32>
      tpu.vector_store %arg4[%c0_21, %c0_22], %47 {strides = array<i32>} : memref<8x128xf32, #tpu.memory_space<vmem>>, vector<8x128xf32>,
    } else {
    }
    %c4096_i32_15 = arith.constant 4096 : i32
    %40 = arith.addi %35, %c4096_i32_15 : i32
    %c8_i32_16 = arith.constant 8 : i32
    %41 = arith.cmpi sgt, %40, %c8_i32_16 : i32
    %42 = arith.extui %41 : i1 to i32
    %c0_i32_17 = arith.constant 0 : i32
    %43 = arith.cmpi ne, %42, %c0_i32_17 : i32
    scf.if %43 {
      %44 = tpu.iota {dimensions = array<i32: 0>} : vector<32x128xi32>
      %45 = tpu.iota {dimensions = array<i32: 1>} : vector<32x128xi32>
      %c128_i32 = arith.constant 128 : i32
      %46 = vector.broadcast %c128_i32 : i32 to vector<32x128xi32>
      %47 = arith.muli %44, %46 : vector<32x128xi32>
      %48 = vector.broadcast %35 : i32 to vector<32x128xi32>
      %49 = arith.addi %48, %47 : vector<32x128xi32>
      %50 = arith.addi %49, %45 : vector<32x128xi32>
      %c8_i32_18 = arith.constant 8 : i32
      %51 = vector.broadcast %c8_i32_18 : i32 to vector<32x128xi32>
      %52 = arith.cmpi slt, %50, %51 : vector<32x128xi32>
      %cst_19 = arith.constant 0.000000e+00 : f32
      %53 = vector.broadcast %cst_19 : f32 to vector<32x128xf32>
      %54 = arith.select %52, %32, %53 : vector<32x128xi1>, vector<32x128xf32>
      %c0_20 = arith.constant 0 : index
      %c0_21 = arith.constant 0 : index
      %55 = vector.load %arg4[%c0_20, %c0_21] : memref<8x128xf32, #tpu.memory_space<vmem>>, vector<8x128xf32>
      %56 = vector.shape_cast %54 : vector<32x128xf32> to vector<4x8x128xf32>
      %cst_22 = arith.constant dense<0.000000e+00> : vector<8x128xf32>
      %57 = vector.multi_reduction <add>, %56, %cst_22 [0] : vector<4x8x128xf32> to vector<8x128xf32>
      %58 = arith.addf %55, %57 : vector<8x128xf32>
      %c0_23 = arith.constant 0 : index
      %c0_24 = arith.constant 0 : index
      %59 = vector.load %arg4[%c0_23, %c0_24] : memref<8x128xf32, #tpu.memory_space<vmem>>, vector<8x128xf32>
      tpu.vector_store %arg4[%c0_23, %c0_24], %58 {strides = array<i32>} : memref<8x128xf32, #tpu.memory_space<vmem>>, vector<8x128xf32>,
    } else {
    }
    return
  }
  func.func @transform_0(%arg0: i32, %arg1: i32) -> (i32, i32, i32) {
    %c1_i32 = arith.constant 1 : i32
    %0 = arith.muli %arg0, %c1_i32 : i32
    %1 = arith.addi %0, %arg1 : i32
    %c0_i32 = arith.constant 0 : i32
    %c0_i32_0 = arith.constant 0 : i32
    %c0_i32_1 = arith.constant 0 : i32
    return %c0_i32, %1, %c0_i32_0 : i32, i32, i32
  }
  func.func @transform_1(%arg0: i32, %arg1: i32) -> (i32, i32) {
    %c1_i32 = arith.constant 1 : i32
    %0 = arith.muli %arg0, %c1_i32 : i32
    %1 = arith.addi %0, %arg1 : i32
    %c0_i32 = arith.constant 0 : i32
    %c0_i32_0 = arith.constant 0 : i32
    return %1, %c0_i32 : i32, i32
  }
  func.func @transform_2(%arg0: i32, %arg1: i32) -> (i32, i32) {
    %c0_i32 = arith.constant 0 : i32
    %c0_i32_0 = arith.constant 0 : i32
    return %arg0, %c0_i32 : i32, i32
  }
}

</mosaic_0001>

<llo_original>
// kernel: focal_loss.1
$region0: #{focal_loss.1}
  #allocation0 [shape = 'u32[]', space=smem, size = 0x4, offset = 0x4, fixed_abs, tag = 'smem constant byte address 0x4 - core index']
  #allocation1 [shape = 'u32[144,128]{1,0:T(1,128)}', space=vmem, size = 0x12000, scoped, tag = 'internal scratch']
  %s0 = inlined_call_operand.vmem [shape: f32[2,32,128], index: 0, kind: input, shape index: {}]
  %s1 = inlined_call_operand.vmem [shape: s32[32,128], index: 1, kind: input, shape index: {}]
  %s2 = inlined_call_operand.vmem [shape: f32[8,128], index: 2, kind: output, shape index: {}]
  %s3 = sld [smem:[#allocation0]]
  $region30: #{focal_loss.1} parent=0
    _
  %s5 = ssub.s32 1, %s3
  %s6 = scalar_select 0, %s5, %s3
  // Predicated region
  $region2: #{focal_loss.1} parent=0 // pred_check
    _
  $region3: #{focal_loss.1} parent=0 // pred_check_branch
    %8 = sbr.rel (0) target = $region5
  $region4: #{focal_loss.1} parent=0 // pred_region
    %s9 = sadd.s32 0, 0
    %s10 = smul.u32 4, %s9
    %p11 = scmp.lt.s32.totalorder %s10, 3
    %s12 = scalar_select %p11, %s10, 3
    %s13 = smul.addr %s12, 8
    %s14 = scalar_lea.vmem %s0, %s13
    %s15 = sadd.s32 0, 0
    %s16 = smul.u32 4, %s15
  $region5: #{focal_loss.1} parent=0 // pred_fallthru
    _
  // Predicated region
  $region6: #{focal_loss.1} parent=0 // pred_check
    _
  $region7: #{focal_loss.1} parent=0 // pred_check_branch
    %18 = sbr.rel (0) target = $region9
  $region8: #{focal_loss.1} parent=0 // pred_region
    %s19 = sadd.s32 0, 0
    %s20 = smul.u32 4, %s19
    %p21 = scmp.lt.s32.totalorder %s20, 3
    %s22 = scalar_select %p21, %s20, 3
    %s23 = smul.addr %s22, 8
    %s24 = scalar_lea.vmem %s1, %s23
    %s25 = sadd.s32 0, 0
    %s26 = smul.u32 4, %s25
  $region9: #{focal_loss.1} parent=0 // pred_fallthru
    _
  %s27 = sadd.s32 0, 0
  %s28 = smul.u32 4, %s27
  %p29 = scmp.lt.s32.totalorder %s28, 3
  %s30 = scalar_select %p29, %s28, 3
  %s31 = smul.addr %s30, 8
  %s32 = scalar_lea.vmem %s0, %s31
  %s33 = sadd.s32 0, 0
  %s34 = smul.u32 4, %s33
  %p35 = scmp.lt.s32.totalorder %s34, 3
  %s36 = scalar_select %p35, %s34, 3
  %s37 = smul.addr %s36, 8
  %s38 = scalar_lea.vmem %s1, %s37
  %s39 = sadd.s32 0, 0
  %s40 = smul.u32 4, %s39
  %p41 = scmp.lt.s32.totalorder %s40, 3
  %s42 = scalar_select %p41, %s40, 3
  %s43 = smul.addr %s42, 8
  %s44 = scalar_lea.vmem %s0, %s43
  %s45 = sadd.s32 0, 0
  %s46 = smul.u32 4, %s45
  %s47 = sadd.s32 0, 0
  %s48 = smul.u32 4, %s47
  %p49 = scmp.lt.s32.totalorder %s48, 3
  %s50 = scalar_select %p49, %s48, 3
  %s51 = smul.addr %s50, 8
  %s52 = scalar_lea.vmem %s1, %s51
  %s53 = sadd.s32 0, 0
  %s54 = smul.u32 4, %s53
  %p55 = scmp.eq.s32.totalorder 0, 0
  // Predicated region
  $region10: #{focal_loss.1} parent=0 // pred_check
    %p56 = pneg %p55
  $region11: #{focal_loss.1} parent=0 // pred_check_branch
    %58 = sbr.rel (%p56) target = $region13
  $region12: #{focal_loss.1} parent=0 // pred_region
    %59 = vst [vmem:[%s2] sm:$0xff] 0.0
  $region13: #{focal_loss.1} parent=0 // pred_fallthru
    _
  %v60 = vld [vmem:[%s44] sm:$0xff]
  %v61 = vld [vmem:[%s44 + $0x8] sm:$0xff]
  %v62 = vld [vmem:[%s44 + $0x10] sm:$0xff]
  %v63 = vld [vmem:[%s44 + $0x18] sm:$0xff]
  %s64 = scalar_lea.vmem %s44, 32
  %v65 = vld [vmem:[%s64] sm:$0xff]
  %v66 = vld [vmem:[%s64 + $0x8] sm:$0xff]
  %v67 = vld [vmem:[%s64 + $0x10] sm:$0xff]
  %v68 = vld [vmem:[%s64 + $0x18] sm:$0xff]
  %v69 = vld [vmem:[%s52] sm:$0xff]
  %v70 = vld [vmem:[%s52 + $0x8] sm:$0xff]
  %v71 = vld [vmem:[%s52 + $0x10] sm:$0xff]
  %v72 = vld [vmem:[%s52 + $0x18] sm:$0xff]
  %vm73 = vcmp.ne.s32.totalorder %v69, 0
  %vm74 = vcmp.ne.s32.totalorder %v70, 0
  %vm75 = vcmp.ne.s32.totalorder %v71, 0
  %vm76 = vcmp.ne.s32.totalorder %v72, 0
  %v77 = vsub.f32 %v65, %v60
  %v78 = vsub.f32 %v66, %v61
  %v79 = vsub.f32 %v67, %v62
  %v80 = vsub.f32 %v68, %v63
  %v81 = vand.u32 2147483647, %v77
  %v82 = vand.u32 2147483647, %v78
  %v83 = vand.u32 2147483647, %v79
  %v84 = vand.u32 2147483647, %v80
  %vm85 = vcmp.ge.f32.partialorder %v77, 0.0
  %vm86 = vcmp.ge.f32.partialorder %v78, 0.0
  %vm87 = vcmp.ge.f32.partialorder %v79, 0.0
  %vm88 = vcmp.ge.f32.partialorder %v80, 0.0
  %vm89 = vmxor %vm85, %vm73
  %vm90 = vmxor %vm86, %vm74
  %vm91 = vmxor %vm87, %vm75
  %vm92 = vmxor %vm88, %vm76
  %vm93 = vmxor %vm89, 1
  %vm94 = vmxor %vm90, 1
  %vm95 = vmxor %vm91, 1
  %vm96 = vmxor %vm92, 1
  %v97 = vsub.f32 0.0, %v81
  %v98 = vsub.f32 0.0, %v82
  %v99 = vsub.f32 0.0, %v83
  %v100 = vsub.f32 0.0, %v84
  %v101 = vmul.f32 %v97, 1.442695
  %v102 = vpow.pop %v101
  %v103 = vmul.f32 %v98, 1.442695
  %v104 = vpow.pop %v103
  %v105 = vmul.f32 %v99, 1.442695
  %v106 = vpow.pop %v105
  %v107 = vmul.f32 %v100, 1.442695
  %v108 = vpow.pop %v107
  %v109 = vadd.f32 %v102, 1.0
  %v110 = vlog2.pop %v109
  %v111 = vmul.f32 %v110, 0.6931472
  %v112 = vmul.f32 -0.5, %v102
  %v113 = vadd.f32 %v112, 1.0
  %v114 = vmul.f32 %v113, %v102
  %v115 = vand.u32 2147483647, %v102
  %vm116 = vcmp.lt.f32.partialorder %v115, 0.0004427343
  %v117 = vsel %vm116, %v114, %v111
  %v118 = vadd.f32 %v104, 1.0
  %v119 = vlog2.pop %v118
  %v120 = vmul.f32 %v119, 0.6931472
  %v121 = vmul.f32 -0.5, %v104
  %v122 = vadd.f32 %v121, 1.0
  %v123 = vmul.f32 %v122, %v104
  %v124 = vand.u32 2147483647, %v104
  %vm125 = vcmp.lt.f32.partialorder %v124, 0.0004427343
  %v126 = vsel %vm125, %v123, %v120
  %v127 = vadd.f32 %v106, 1.0
  %v128 = vlog2.pop %v127
  %v129 = vmul.f32 %v128, 0.6931472
  %v130 = vmul.f32 -0.5, %v106
  %v131 = vadd.f32 %v130, 1.0
  %v132 = vmul.f32 %v131, %v106
  %v133 = vand.u32 2147483647, %v106
  %vm134 = vcmp.lt.f32.partialorder %v133, 0.0004427343
  %v135 = vsel %vm134, %v132, %v129
  %v136 = vadd.f32 %v108, 1.0
  %v137 = vlog2.pop %v136
  %v138 = vmul.f32 %v137, 0.6931472
  %v139 = vmul.f32 -0.5, %v108
  %v140 = vadd.f32 %v139, 1.0
  %v141 = vmul.f32 %v140, %v108
  %v142 = vand.u32 2147483647, %v108
  %vm143 = vcmp.lt.f32.partialorder %v142, 0.0004427343
  %v144 = vsel %vm143, %v141, %v138
  %v145 = vadd.f32 %v81, %v117
  %v146 = vadd.f32 %v82, %v126
  %v147 = vadd.f32 %v83, %v135
  %v148 = vadd.f32 %v84, %v144
  %v149 = vsel %vm93, %v117, %v145
  %v150 = vsel %vm94, %v126, %v146
  %v151 = vsel %vm95, %v135, %v147
  %v152 = vsel %vm96, %v144, %v148
  %v153 = vadd.f32 %v102, 1.0
  %v154 = vadd.f32 %v104, 1.0
  %v155 = vadd.f32 %v106, 1.0
  %v156 = vadd.f32 %v108, 1.0
  %v157 = vrcp.pop %v153
  %v158 = vrcp.pop %v154
  %v159 = vrcp.pop %v155
  %v160 = vrcp.pop %v156
  %v161 = vmul.f32 %v102, %v157
  %v162 = vmul.f32 %v104, %v158
  %v163 = vmul.f32 %v106, %v159
  %v164 = vmul.f32 %v108, %v160
  %v165 = vsel %vm93, %v161, %v157
  %v166 = vsel %vm94, %v162, %v158
  %v167 = vsel %vm95, %v163, %v159
  %v168 = vsel %vm96, %v164, %v160
  %v169 = vsel %vm73, 0.8, 1.0
  %v170 = vsel %vm74, 0.8, 1.0
  %v171 = vsel %vm75, 0.8, 1.0
  %v172 = vsel %vm76, 0.8, 1.0
  %v173 = vmul.f32 %v165, %v165
  %v174 = vmul.f32 %v166, %v166
  %v175 = vmul.f32 %v167, %v167
  %v176 = vmul.f32 %v168, %v168
  %v177 = vmul.f32 %v169, %v173
  %v178 = vmul.f32 %v170, %v174
  %v179 = vmul.f32 %v171, %v175
  %v180 = vmul.f32 %v172, %v176
  %v181 = vmul.f32 %v177, %v149
  %v182 = vmul.f32 %v178, %v150
  %v183 = vmul.f32 %v179, %v151
  %v184 = vmul.f32 %v180, %v152
  %s185 = sadd.s32 0, 0
  %s186 = smul.u32 %s185, 4096
  %s187 = sadd.s32 %s186, 4096
  %p188 = scmp.le.s32.totalorder %s187, 8
  // Predicated region
  $region14: #{focal_loss.1} parent=0 // pred_check
    %p189 = pneg %p188
  $region15: #{focal_loss.1} parent=0 // pred_check_branch
    %191 = sbr.rel (%p189) target = $region17
  $region16: #{focal_loss.1} parent=0 // pred_region
    %v192 = vld [vmem:[%s2] sm:$0xff]
    %v193 = vadd.f32 %v181, %v182
    %v194 = vadd.f32 %v193, %v183
    %v195 = vadd.f32 %v194, %v184
    %v196 = vadd.f32 %v192, %v195
    %197 = vst [vmem:[%s2] sm:$0xff] %v196
  $region17: #{focal_loss.1} parent=0 // pred_fallthru
    _
  %p198 = scmp.gt.s32.totalorder %s187, 8
  // Predicated region
  $region18: #{focal_loss.1} parent=0 // pred_check
    %p199 = pneg %p198
  $region19: #{focal_loss.1} parent=0 // pred_check_branch
    %201 = sbr.rel (%p199) target = $region21
  $region20: #{focal_loss.1} parent=0 // pred_region
    %v202 = vlaneseq
    %v203 = vshrl.u32 %v202, 7
    %v204 = vadd.s32 %v203, 8
    %v205 = vadd.s32 %v203, 16
    %v206 = vadd.s32 %v203, 24
    %v207 = vlaneseq
    %v208 = vand.u32 %v207, 127
    %v209 = vmul.u32 %v203, 128
    %v210 = vmul.u32 %v204, 128
    %v211 = vmul.u32 %v205, 128
    %v212 = vmul.u32 %v206, 128
    %v213 = vstv %s186
    %v214 = vadd.s32 %v213, %v209
    %v215 = vadd.s32 %v213, %v210
    %v216 = vadd.s32 %v213, %v211
    %v217 = vadd.s32 %v213, %v212
    %v218 = vadd.s32 %v214, %v208
    %v219 = vadd.s32 %v215, %v208
    %v220 = vadd.s32 %v216, %v208
    %v221 = vadd.s32 %v217, %v208
    %vm222 = vcmp.lt.s32.totalorder %v218, 8
    %vm223 = vcmp.lt.s32.totalorder %v219, 8
    %vm224 = vcmp.lt.s32.totalorder %v220, 8
    %vm225 = vcmp.lt.s32.totalorder %v221, 8
    %v226 = vsel %vm222, %v181, 0.0
    %v227 = vsel %vm223, %v182, 0.0
    %v228 = vsel %vm224, %v183, 0.0
    %v229 = vsel %vm225, %v184, 0.0
    %v230 = vld [vmem:[%s2] sm:$0xff]
    %v231 = vadd.f32 %v226, %v227
    %v232 = vadd.f32 %v231, %v228
    %v233 = vadd.f32 %v232, %v229
    %v234 = vadd.f32 %v230, %v233
    %235 = vst [vmem:[%s2] sm:$0xff] %v234
  $region21: #{focal_loss.1} parent=0 // pred_fallthru
    _
  // Predicated region
  $region22: #{focal_loss.1} parent=0 // pred_check
    _
  $region23: #{focal_loss.1} parent=0 // pred_check_branch
    %237 = sbr.rel (0) target = $region25
  $region24: #{focal_loss.1} parent=0 // pred_region
    _
  $region25: #{focal_loss.1} parent=0 // pred_fallthru
    _
  // Predicated region
  $region26: #{focal_loss.1} parent=0 // pred_check
    _
  $region27: #{focal_loss.1} parent=0 // pred_check_branch
    %239 = sbr.rel (0) target = $region29
  $region28: #{focal_loss.1} parent=0 // pred_region
    _
  $region29: #{focal_loss.1} parent=0 // pred_fallthru
    _

</llo_original>
